<compile_context>
chip_gen: v7x
topology: tpu7x:2x2x1
jax: 0.10.0
libtpu: 0.0.40
codegen_flags: <defaults>
</compile_context>

<pallas_src>
import jax
import jax.numpy as jnp
from jax import lax
from jax.experimental import pallas as pl
from jax.experimental.pallas import tpu as pltpu


def _graph_prop_kernel(a_ref, x_ref, w_ref, b_ref, o_ref, acc_ref):
    # a_ref  : VMEM f32 [TN, TK]  tile of the dense propagation matrix
    # x_ref  : VMEM f32 [TK, Hp]  node-feature tile along the contraction axis
    # w_ref  : VMEM f32 [Hp, Hp]  nn.Linear weight, [out, in] (untransposed)
    # b_ref  : VMEM f32 [1,  Hp]  bias
    # o_ref  : VMEM f32 [TN, Hp]
    # acc_ref: VMEM f32 [TN, Hp]  message-aggregation accumulator
    k = pl.program_id(1)

    @pl.when(k == 0)
    def _():
        acc_ref[...] = jnp.zeros_like(acc_ref)

    # Partial message aggregation for this (row, K) tile on the MXU.
    acc_ref[...] += jnp.dot(
        a_ref[...], x_ref[...], preferred_element_type=jnp.float32
    )

    @pl.when(k == pl.num_programs(1) - 1)
    def _():
        # nn.Linear: agg @ W^T + b, contracting against the "in" axis of the
        # untransposed [out, in] weight (no separate transpose op).
        out = lax.dot_general(
            acc_ref[...],
            w_ref[...],
            dimension_numbers=(((1,), (1,)), ((), ())),
            preferred_element_type=jnp.float32,
        )
        o_ref[...] = (out + b_ref[...]).astype(o_ref.dtype)


def _round_up(v, m):
    return (v + m - 1) // m * m


def sentence_graph_prop(
    x, edge_index, edge_weight, weight, bias, *, row_tile=256, k_tile=512
):
    """Pallas forward of SentenceGraphProp.

    x: [N, H] f32, edge_index: [2, E] int, edge_weight: [E] f32,
    weight: [H, H] (nn.Linear weight, [out, in]), bias: [H].
    """
    n, h = x.shape
    x = x.astype(jnp.float32)
    weight = weight.astype(jnp.float32)
    bias = bias.astype(jnp.float32)
    edge_weight = edge_weight.astype(jnp.float32)
    row = edge_index[0].astype(jnp.int32)
    col = edge_index[1].astype(jnp.int32)

    # ---- padding: lane-dense hidden & contraction dims, grid-even rows ----
    hp = _round_up(h, 128)                       # hidden (lane) dim
    tn = min(row_tile, _round_up(n, 8))          # rows per grid step (x8)
    n_rows = _round_up(n, tn)                    # padded row count
    tk = min(k_tile, _round_up(n, 128))          # contraction tile (x128)
    n_k = _round_up(n, tk)                       # padded contraction count
    grid = (n_rows // tn, n_k // tk)

    x_p = jnp.zeros((n_k, hp), jnp.float32).at[:n, :h].set(x)
    w_p = jnp.zeros((hp, hp), jnp.float32).at[:h, :h].set(weight)
    b_p = jnp.zeros((1, hp), jnp.float32).at[0, :h].set(bias)

    # Dense propagation matrix: A[r, c] += w_e (duplicate edges accumulate),
    # exactly matching index_add_ semantics.  Zero-padded rows/cols contribute
    # nothing to the matmul.
    # TODO(synk): the O(E) irregular scatter stays an XLA scatter-add in the
    # wrapper (no clean Pallas gather/scatter for arbitrary edge lists); all
    # O(N^2*H + N*H^2) FLOPs run on the MXU inside the kernel.
    a = jnp.zeros((n_rows, n_k), jnp.float32).at[row, col].add(edge_weight)

    # ---- VMEM budget (double-buffered blocks) + scheduler cost hint ----
    blk_bytes = 4 * (tn * tk + tk * hp + hp * hp + hp + 2 * tn * hp)
    vmem_limit = int(min(max(2 * blk_bytes + (1 << 20), 16 << 20), 64 << 20))
    cost = pl.CostEstimate(
        flops=2 * n_rows * n_k * hp + 2 * n_rows * hp * hp,
        transcendentals=0,
        bytes_accessed=4 * (n_rows * n_k + n_k * hp + hp * hp + hp + n_rows * hp),
    )

    out_p = pl.pallas_call(
        _graph_prop_kernel,
        out_shape=jax.ShapeDtypeStruct((n_rows, hp), jnp.float32),
        grid=grid,
        in_specs=[
            pl.BlockSpec((tn, tk), lambda i, k: (i, k)),   # A: (row, K) tile
            pl.BlockSpec((tk, hp), lambda i, k: (k, 0)),   # x: K tile
            pl.BlockSpec((hp, hp), lambda i, k: (0, 0)),   # W: resident
            pl.BlockSpec((1, hp), lambda i, k: (0, 0)),    # bias: resident
        ],
        out_specs=pl.BlockSpec((tn, hp), lambda i, k: (i, 0)),
        scratch_shapes=[pltpu.VMEM((tn, hp), jnp.float32)],
        compiler_params=pltpu.CompilerParams(
            dimension_semantics=("parallel", "arbitrary"),
            vmem_limit_bytes=vmem_limit,
        ),
        cost_estimate=cost,
    )(a, x_p, w_p, b_p)

    return out_p[:n, :h]


def _reference(x, edge_index, edge_weight, weight, bias):
    row, col = edge_index
    messages = x[col] * edge_weight[:, None]
    out = jnp.zeros_like(x).at[row].add(messages)
    return out @ weight.T + bias


if __name__ == "__main__":
    key = jax.random.PRNGKey(0)
    k_x, k_ei, k_ew, k_w, k_b = jax.random.split(key, 5)

    N, H, E = 8, 32, 16
    x = jax.random.normal(k_x, (N, H), dtype=jnp.float32)
    edge_index = jax.random.randint(k_ei, (2, E), 0, N, dtype=jnp.int32)
    edge_weight = jax.random.uniform(k_ew, (E,), dtype=jnp.float32)

    # Deterministic nn.Linear(hidden_dim, hidden_dim) parameters.
    bound = 1.0 / (H ** 0.5)
    weight = jax.random.uniform(
        k_w, (H, H), minval=-bound, maxval=bound, dtype=jnp.float32
    )
    bias = jax.random.uniform(
        k_b, (H,), minval=-bound, maxval=bound, dtype=jnp.float32
    )

    out = sentence_graph_prop(x, edge_index, edge_weight, weight, bias)
    out = jax.block_until_ready(out)

    ref = _reference(x, edge_index, edge_weight, weight, bias)
    assert out.shape == (N, H)
    assert jnp.allclose(out, ref, atol=1e-4, rtol=1e-4), "mismatch vs reference"

    print("KERNEL_OK")
</pallas_src>

<mosaic_0001>
module attributes {stable_mosaic.version = 11 : i64} {
  func.func @_graph_prop_kernel(%arg0: i32, %arg1: i32, %arg2: memref<8x128xf32, #tpu.memory_space<vmem>>, %arg3: memref<128x128xf32, #tpu.memory_space<vmem>>, %arg4: memref<128x128xf32, #tpu.memory_space<vmem>>, %arg5: memref<1x128xf32, #tpu.memory_space<vmem>>, %arg6: memref<8x128xf32, #tpu.memory_space<vmem>>, %arg7: memref<8x128xf32, #tpu.memory_space<vmem>>) attributes {dimension_semantics = [#tpu.dimension_semantics<parallel>, #tpu.dimension_semantics<arbitrary>], iteration_bounds = array<i64: 1, 1>, scalar_prefetch = 0 : i64, scratch_operands = 1 : i64, tpu.core_type = #tpu.core_type<tc>, window_params = [{transform_indices = @transform_0, window_bounds = array<i64: 8, 128>}, {transform_indices = @transform_1, window_bounds = array<i64: 128, 128>}, {pipeline_mode = #tpu.pipeline_mode<synchronous>, transform_indices = @transform_2, window_bounds = array<i64: 128, 128>}, {pipeline_mode = #tpu.pipeline_mode<synchronous>, transform_indices = @transform_3, window_bounds = array<i64: 1, 128>}, {transform_indices = @transform_4, window_bounds = array<i64: 8, 128>}]} {
    %c0_i32 = arith.constant 0 : i32
    %0 = arith.cmpi eq, %arg1, %c0_i32 : i32
    %1 = arith.extui %0 : i1 to i32
    %c0_i32_0 = arith.constant 0 : i32
    %2 = arith.cmpi ne, %1, %c0_i32_0 : i32
    scf.if %2 {
      %cst_10 = arith.constant 0.000000e+00 : f32
      %12 = vector.broadcast %cst_10 : f32 to vector<8x128xf32>
      %c0_11 = arith.constant 0 : index
      %c0_12 = arith.constant 0 : index
      %13 = vector.load %arg7[%c0_11, %c0_12] : memref<8x128xf32, #tpu.memory_space<vmem>>, vector<8x128xf32>
      tpu.vector_store %arg7[%c0_11, %c0_12], %12 {strides = array<i32>} : memref<8x128xf32, #tpu.memory_space<vmem>>, vector<8x128xf32>,
    } else {
    }
    %c0 = arith.constant 0 : index
    %c0_1 = arith.constant 0 : index
    %3 = vector.load %arg7[%c0, %c0_1] : memref<8x128xf32, #tpu.memory_space<vmem>>, vector<8x128xf32>
    %c0_2 = arith.constant 0 : index
    %c0_3 = arith.constant 0 : index
    %4 = vector.load %arg2[%c0_2, %c0_3] : memref<8x128xf32, #tpu.memory_space<vmem>>, vector<8x128xf32>
    %c0_4 = arith.constant 0 : index
    %c0_5 = arith.constant 0 : index
    %5 = vector.load %arg3[%c0_4, %c0_5] : memref<128x128xf32, #tpu.memory_space<vmem>>, vector<128x128xf32>
    %cst = arith.constant dense<0.000000e+00> : vector<8x128xf32>
    %6 = tpu.matmul %4, %5, %cst {dimension_numbers = #tpu.dot_dimension_numbers<[1], [0], [0], [1], [0, 0, 1, 1], [], []>} : vector<8x128xf32>, vector<128x128xf32>, vector<8x128xf32> -> vector<8x128xf32>
    %7 = arith.addf %3, %6 : vector<8x128xf32>
    %c0_6 = arith.constant 0 : index
    %c0_7 = arith.constant 0 : index
    %8 = vector.load %arg7[%c0_6, %c0_7] : memref<8x128xf32, #tpu.memory_space<vmem>>, vector<8x128xf32>
    tpu.vector_store %arg7[%c0_6, %c0_7], %7 {strides = array<i32>} : memref<8x128xf32, #tpu.memory_space<vmem>>, vector<8x128xf32>,
    %c0_i32_8 = arith.constant 0 : i32
    %9 = arith.cmpi eq, %arg1, %c0_i32_8 : i32
    %10 = arith.extui %9 : i1 to i32
    %c0_i32_9 = arith.constant 0 : i32
    %11 = arith.cmpi ne, %10, %c0_i32_9 : i32
    scf.if %11 {
      %c0_10 = arith.constant 0 : index
      %c0_11 = arith.constant 0 : index
      %12 = vector.load %arg7[%c0_10, %c0_11] : memref<8x128xf32, #tpu.memory_space<vmem>>, vector<8x128xf32>
      %c0_12 = arith.constant 0 : index
      %c0_13 = arith.constant 0 : index
      %13 = vector.load %arg4[%c0_12, %c0_13] : memref<128x128xf32, #tpu.memory_space<vmem>>, vector<128x128xf32>
      %cst_14 = arith.constant dense<0.000000e+00> : vector<8x128xf32>
      %14 = tpu.matmul %12, %13, %cst_14 {dimension_numbers = #tpu.dot_dimension_numbers<[1], [1], [0], [0], [0, 0, 1, 0], [], []>} : vector<8x128xf32>, vector<128x128xf32>, vector<8x128xf32> -> vector<8x128xf32>
      %c0_15 = arith.constant 0 : index
      %c0_16 = arith.constant 0 : index
      %15 = vector.load %arg5[%c0_15, %c0_16] : memref<1x128xf32, #tpu.memory_space<vmem>>, vector<1x128xf32>
      %16 = vector.broadcast %15 : vector<1x128xf32> to vector<8x128xf32>
      %17 = arith.addf %14, %16 : vector<8x128xf32>
      %c0_17 = arith.constant 0 : index
      %c0_18 = arith.constant 0 : index
      %18 = vector.load %arg6[%c0_17, %c0_18] : memref<8x128xf32, #tpu.memory_space<vmem>>, vector<8x128xf32>
      tpu.vector_store %arg6[%c0_17, %c0_18], %17 {strides = array<i32>} : memref<8x128xf32, #tpu.memory_space<vmem>>, vector<8x128xf32>,
    } else {
    }
    return
  }
  func.func @transform_0(%arg0: i32, %arg1: i32) -> (i32, i32) {
    %c0_i32 = arith.constant 0 : i32
    return %arg0, %arg1 : i32, i32
  }
  func.func @transform_1(%arg0: i32, %arg1: i32) -> (i32, i32) {
    %c0_i32 = arith.constant 0 : i32
    %c0_i32_0 = arith.constant 0 : i32
    return %arg1, %c0_i32 : i32, i32
  }
  func.func @transform_2(%arg0: i32, %arg1: i32) -> (i32, i32) {
    %c0_i32 = arith.constant 0 : i32
    %c0_i32_0 = arith.constant 0 : i32
    %c0_i32_1 = arith.constant 0 : i32
    return %c0_i32, %c0_i32_0 : i32, i32
  }
  func.func @transform_3(%arg0: i32, %arg1: i32) -> (i32, i32) {
    %c0_i32 = arith.constant 0 : i32
    %c0_i32_0 = arith.constant 0 : i32
    %c0_i32_1 = arith.constant 0 : i32
    return %c0_i32, %c0_i32_0 : i32, i32
  }
  func.func @transform_4(%arg0: i32, %arg1: i32) -> (i32, i32) {
    %c0_i32 = arith.constant 0 : i32
    %c0_i32_0 = arith.constant 0 : i32
    return %arg0, %c0_i32 : i32, i32
  }
}

</mosaic_0001>

<llo_original>
// kernel: tpu_custom_call.1
$region0: #{tpu_custom_call.1}
  #allocation0 [shape = 'u32[]', space=smem, size = 0x4, offset = 0x4, fixed_abs, tag = 'smem constant byte address 0x4 - core index']
  #allocation1 [shape = 'u32[144,128]{1,0:T(1,128)}', space=vmem, size = 0x12000, scoped, tag = 'internal scratch']
  #allocation2 [shape = 'f32[8,128]{1,0:T(8,128)}', space=vmem, size = 0x1000, scoped, tag = 'scratch operand']
  %s0 = inlined_call_operand.hbm [shape: f32[8,128], index: 0, kind: input, shape index: {}]
  %s1 = inlined_call_operand.hbm [shape: f32[128,128], index: 1, kind: input, shape index: {}]
  %s2 = inlined_call_operand.hbm [shape: f32[128,128], index: 2, kind: input, shape index: {}]
  %s3 = inlined_call_operand.vmem [shape: f32[1,128], index: 3, kind: input, shape index: {}]
  %s4 = inlined_call_operand.hbm [shape: f32[8,128], index: 4, kind: output, shape index: {}]
  %s5 = sld [smem:[#allocation0]]
  $region46: #{tpu_custom_call.1} parent=0
    _
  %s7 = ssub.s32 1, %s5
  %s8 = scalar_select 0, %s7, %s5
  $region1: #{tpu_custom_call.1} parent=0
    #allocation3 [shape = 'u8[4096]{0}', space=vmem, size = 0x1000, scoped, tag = 'input window, operand 0, single buffered']
    #allocation4 [shape = 's32[1]{0}', space=sflag, size = 0x4, scoped, tag = 'scoped memory for tpu_custom_call.1']
    #allocation5 [shape = 's32[1]{0}', space=sflag, size = 0x4, scoped, tag = 'scoped memory for tpu_custom_call.1']
    #allocation6 [shape = 'u8[65536]{0}', space=vmem, size = 0x10000, scoped, tag = 'input window, operand 1, single buffered']
    #allocation7 [shape = 's32[1]{0}', space=sflag, size = 0x4, scoped, tag = 'scoped memory for tpu_custom_call.1']
    #allocation8 [shape = 'u8[65536]{0}', space=vmem, size = 0x10000, scoped, tag = 'input window, operand 2, single buffered']
    #allocation9 [shape = 'u8[4096]{0}', space=vmem, size = 0x1000, scoped, tag = 'output window, operand 0, single buffered']
    %9 = vsyncpa [#allocation4], 0
    %10 = vsyncpa [#allocation7], 0
    %11 = vsyncpa [#allocation5], 0
    // Predicated region
    $region2: #{tpu_custom_call.1} parent=1 // pred_check
      _
    $region3: #{tpu_custom_call.1} parent=1 // pred_check_branch
      %13 = sbr.rel (0) target = $region5
    $region4: #{tpu_custom_call.1} parent=1 // pred_region
      %s15 = ssub.s32 128, 128
      %16 = vsyncadd [#allocation4], %s15
      %s18 = sshll.u32 [#allocation3], 4
      %s19 = int_to_ptr.vmem [resolvable:$true] %s18
      %21 = dma.hbm_to_vmem [thread:$0]  %s0, 128, %s19, [#allocation4]
    $region5: #{tpu_custom_call.1} parent=1 // pred_fallthru
      _
    // Predicated region
    $region6: #{tpu_custom_call.1} parent=1 // pred_check
      _
    $region7: #{tpu_custom_call.1} parent=1 // pred_check_branch
      %23 = sbr.rel (0) target = $region9
    $region8: #{tpu_custom_call.1} parent=1 // pred_region
      %s25 = ssub.s32 2048, 2048
      %26 = vsyncadd [#allocation7], %s25
      %s27 = sshll.u32 [#allocation6], 4
      %s28 = int_to_ptr.vmem [resolvable:$true] %s27
      %33 = dma.hbm_to_vmem [thread:$0]  %s1, 2048, %s28, [#allocation7], 128, 128, 8
    $region9: #{tpu_custom_call.1} parent=1 // pred_fallthru
      _
    // Predicated region
    $region10: #{tpu_custom_call.1} parent=1 // pred_check
      _
    $region11: #{tpu_custom_call.1} parent=1 // pred_check_branch
      %35 = sbr.rel (0) target = $region13
    $region12: #{tpu_custom_call.1} parent=1 // pred_region
      %s37 = ssub.s32 2048, 2048
      %38 = vsyncadd [#allocation7], %s37
      %s39 = sshll.u32 [#allocation8], 4
      %s40 = int_to_ptr.vmem [resolvable:$true] %s39
      %45 = dma.hbm_to_vmem [thread:$0]  %s2, 2048, %s40, [#allocation7], 128, 128, 8
    $region13: #{tpu_custom_call.1} parent=1 // pred_fallthru
      _
    // Predicated region
    $region14: #{tpu_custom_call.1} parent=1 // pred_check
      _
    $region15: #{tpu_custom_call.1} parent=1 // pred_check_branch
      %47 = sbr.rel (0) target = $region17
    $region16: #{tpu_custom_call.1} parent=1 // pred_region
      _
    $region17: #{tpu_custom_call.1} parent=1 // pred_fallthru
      _
    // Predicated region
    $region18: #{tpu_custom_call.1} parent=1 // pred_check
      _
    $region19: #{tpu_custom_call.1} parent=1 // pred_check_branch
      %49 = sbr.rel (0) target = $region21
    $region20: #{tpu_custom_call.1} parent=1 // pred_region
      %50 = dma.done [#allocation4], 128
    $region21: #{tpu_custom_call.1} parent=1 // pred_fallthru
      _
    // Predicated region
    $region22: #{tpu_custom_call.1} parent=1 // pred_check
      _
    $region23: #{tpu_custom_call.1} parent=1 // pred_check_branch
      %52 = sbr.rel (0) target = $region25
    $region24: #{tpu_custom_call.1} parent=1 // pred_region
      %53 = dma.done [#allocation7], 2048
    $region25: #{tpu_custom_call.1} parent=1 // pred_fallthru
      _
    // Predicated region
    $region26: #{tpu_custom_call.1} parent=1 // pred_check
      _
    $region27: #{tpu_custom_call.1} parent=1 // pred_check_branch
      %55 = sbr.rel (0) target = $region29
    $region28: #{tpu_custom_call.1} parent=1 // pred_region
      %56 = dma.done [#allocation7], 2048
    $region29: #{tpu_custom_call.1} parent=1 // pred_fallthru
      _
    %p57 = scmp.eq.s32.totalorder 0, 0
    // Predicated region
    $region30: #{tpu_custom_call.1} parent=1 // pred_check
      %p58 = pneg %p57
    $region31: #{tpu_custom_call.1} parent=1 // pred_check_branch
      %60 = sbr.rel (%p58) target = $region33
    $region32: #{tpu_custom_call.1} parent=1 // pred_region
      %61 = vst [vmem:[#allocation2] sm:$0xff] 0.0
    $region33: #{tpu_custom_call.1} parent=1 // pred_fallthru
      _
    %v62 = vld [vmem:[#allocation2] sm:$0xff]
    %v63 = vld [vmem:[#allocation3] sm:$0xff]
    %v64 = vld [vmem:[#allocation6] sm:$0xff]
    %v65 = vld [vmem:[#allocation6 + $0x8] sm:$0xff]
    %v66 = vld [vmem:[#allocation6 + $0x10] sm:$0xff]
    %v67 = vld [vmem:[#allocation6 + $0x18] sm:$0xff]
    %v68 = vld [vmem:[#allocation6 + $0x20] sm:$0xff]
    %v69 = vld [vmem:[#allocation6 + $0x28] sm:$0xff]
    %v70 = vld [vmem:[#allocation6 + $0x30] sm:$0xff]
    %v71 = vld [vmem:[#allocation6 + $0x38] sm:$0xff]
    %v72 = vld [vmem:[#allocation6 + $0x40] sm:$0xff]
    %v73 = vld [vmem:[#allocation6 + $0x48] sm:$0xff]
    %v74 = vld [vmem:[#allocation6 + $0x50] sm:$0xff]
    %v75 = vld [vmem:[#allocation6 + $0x58] sm:$0xff]
    %v76 = vld [vmem:[#allocation6 + $0x60] sm:$0xff]
    %v77 = vld [vmem:[#allocation6 + $0x68] sm:$0xff]
    %v78 = vld [vmem:[#allocation6 + $0x70] sm:$0xff]
    %v79 = vld [vmem:[#allocation6 + $0x78] sm:$0xff]
    %80 = vmatprep.subr.mxu0 0.0
    %81 = vmatpush1.msra.mxu0 %v64
    %82 = vmatprep.subr.mxu0 0.0
    %83 = vmatpush1.msra.mxu0 %v65
    %84 = vmatprep.subr.mxu0 0.0
    %85 = vmatpush1.msra.mxu0 %v66
    %86 = vmatprep.subr.mxu0 0.0
    %87 = vmatpush1.msra.mxu0 %v67
    %88 = vmatprep.subr.mxu0 0.0
    %89 = vmatpush1.msra.mxu0 %v68
    %90 = vmatprep.subr.mxu0 0.0
    %91 = vmatpush1.msra.mxu0 %v69
    %92 = vmatprep.subr.mxu0 0.0
    %93 = vmatpush1.msra.mxu0 %v70
    %94 = vmatprep.subr.mxu0 0.0
    %95 = vmatpush1.msra.mxu0 %v71
    %96 = vmatprep.subr.mxu0 0.0
    %97 = vmatpush1.msra.mxu0 %v72
    %98 = vmatprep.subr.mxu0 0.0
    %99 = vmatpush1.msra.mxu0 %v73
    %100 = vmatprep.subr.mxu0 0.0
    %101 = vmatpush1.msra.mxu0 %v74
    %102 = vmatprep.subr.mxu0 0.0
    %103 = vmatpush1.msra.mxu0 %v75
    %104 = vmatprep.subr.mxu0 0.0
    %105 = vmatpush1.msra.mxu0 %v76
    %106 = vmatprep.subr.mxu0 0.0
    %107 = vmatpush1.msra.mxu0 %v77
    %108 = vmatprep.subr.mxu0 0.0
    %109 = vmatpush1.msra.mxu0 %v78
    %110 = vmatprep.subr.mxu0 0.0
    %111 = vmatpush1.msra.mxu0 %v79
    %112 = vmatprep.subr.mxu0 0.0
    %113 = vmatpush1.msra.mxu0 0.0
    %114 = vmatprep.subr.mxu0 0.0
    %115 = vmatpush1.msra.mxu0 0.0
    %116 = vmatprep.subr.mxu0 0.0
    %117 = vmatpush1.msra.mxu0 0.0
    %118 = vmatprep.subr.mxu0 0.0
    %119 = vmatpush1.msra.mxu0 0.0
    %120 = vmatprep.subr.mxu0 0.0
    %121 = vmatpush1.msra.mxu0 0.0
    %122 = vmatprep.subr.mxu0 0.0
    %123 = vmatpush1.msra.mxu0 0.0
    %124 = vmatprep.subr.mxu0 0.0
    %125 = vmatpush1.msra.mxu0 0.0
    %126 = vmatprep.subr.mxu0 0.0
    %127 = vmatpush1.msra.mxu0 0.0
    %128 = vmatprep.subr.mxu0 0.0
    %129 = vmatpush1.msra.mxu0 0.0
    %130 = vmatprep.subr.mxu0 0.0
    %131 = vmatpush1.msra.mxu0 0.0
    %132 = vmatprep.subr.mxu0 0.0
    %133 = vmatpush1.msra.mxu0 0.0
    %134 = vmatprep.subr.mxu0 0.0
    %135 = vmatpush1.msra.mxu0 0.0
    %136 = vmatprep.subr.mxu0 0.0
    %137 = vmatpush1.msra.mxu0 0.0
    %138 = vmatprep.subr.mxu0 0.0
    %139 = vmatpush1.msra.mxu0 0.0
    %140 = vmatprep.subr.mxu0 0.0
    %141 = vmatpush1.msra.mxu0 0.0
    %142 = vmatprep.subr.mxu0 0.0
    %143 = vmatpush1.msra.mxu0 0.0
    %144 = vmatprep.mubr.f32.mxu0 0.0
    %145 = vmatmul.mubr.f32.gmra.mrb[0].mxu0 %v63
    %v146 = vpop.f32.mrb[0].mxu0
    %v147 = vadd.f32 0.0, %v146
    %v148 = vpop.f32.mrb[0].mxu0
    %149 = vdwg.mxu0
    %v150 = vadd.f32 %v62, %v147
    %151 = vst [vmem:[#allocation2] sm:$0xff] %v150
    // Predicated region
    $region34: #{tpu_custom_call.1} parent=1 // pred_check
      %p152 = pneg %p57
    $region35: #{tpu_custom_call.1} parent=1 // pred_check_branch
      %154 = sbr.rel (%p152) target = $region37
    $region36: #{tpu_custom_call.1} parent=1 // pred_region
      %v155 = vld [vmem:[#allocation2] sm:$0xff]
      %v156 = vld [vmem:[#allocation8] sm:$0xff]
      %v157 = vld [vmem:[#allocation8 + $0x8] sm:$0xff]
      %v158 = vld [vmem:[#allocation8 + $0x10] sm:$0xff]
      %v159 = vld [vmem:[#allocation8 + $0x18] sm:$0xff]
      %v160 = vld [vmem:[#allocation8 + $0x20] sm:$0xff]
      %v161 = vld [vmem:[#allocation8 + $0x28] sm:$0xff]
      %v162 = vld [vmem:[#allocation8 + $0x30] sm:$0xff]
      %v163 = vld [vmem:[#allocation8 + $0x38] sm:$0xff]
      %v164 = vld [vmem:[#allocation8 + $0x40] sm:$0xff]
      %v165 = vld [vmem:[#allocation8 + $0x48] sm:$0xff]
      %v166 = vld [vmem:[#allocation8 + $0x50] sm:$0xff]
      %v167 = vld [vmem:[#allocation8 + $0x58] sm:$0xff]
      %v168 = vld [vmem:[#allocation8 + $0x60] sm:$0xff]
      %v169 = vld [vmem:[#allocation8 + $0x68] sm:$0xff]
      %v170 = vld [vmem:[#allocation8 + $0x70] sm:$0xff]
      %v171 = vld [vmem:[#allocation8 + $0x78] sm:$0xff]
      %v172 = vld [vmem:[%s3] sm:$0x1]
      %v174 = vlaneseq
      %v175 = vshrl.u32 %v174, 7
      %v176 = vsub.s32 0, %v175
      %v177 = vrot.slane %v172, %v176
      %179 = vmatprep.subr.mxu0 0.0
      %180 = vmatpush1.xpose.msra.mxu0 %v156
      %181 = vmatprep.subr.mxu0 0.0
      %182 = vmatpush1.xpose.msra.mxu0 %v157
      %183 = vmatprep.subr.mxu0 0.0
      %184 = vmatpush1.xpose.msra.mxu0 %v158
      %185 = vmatprep.subr.mxu0 0.0
      %186 = vmatpush1.xpose.msra.mxu0 %v159
      %187 = vmatprep.subr.mxu0 0.0
      %188 = vmatpush1.xpose.msra.mxu0 %v160
      %189 = vmatprep.subr.mxu0 0.0
      %190 = vmatpush1.xpose.msra.mxu0 %v161
      %191 = vmatprep.subr.mxu0 0.0
      %192 = vmatpush1.xpose.msra.mxu0 %v162
      %193 = vmatprep.subr.mxu0 0.0
      %194 = vmatpush1.xpose.msra.mxu0 %v163
      %195 = vmatprep.subr.mxu0 0.0
      %196 = vmatpush1.xpose.msra.mxu0 %v164
      %197 = vmatprep.subr.mxu0 0.0
      %198 = vmatpush1.xpose.msra.mxu0 %v165
      %199 = vmatprep.subr.mxu0 0.0
      %200 = vmatpush1.xpose.msra.mxu0 %v166
      %201 = vmatprep.subr.mxu0 0.0
      %202 = vmatpush1.xpose.msra.mxu0 %v167
      %203 = vmatprep.subr.mxu0 0.0
      %204 = vmatpush1.xpose.msra.mxu0 %v168
      %205 = vmatprep.subr.mxu0 0.0
      %206 = vmatpush1.xpose.msra.mxu0 %v169
      %207 = vmatprep.subr.mxu0 0.0
      %208 = vmatpush1.xpose.msra.mxu0 %v170
      %209 = vmatprep.subr.mxu0 0.0
      %210 = vmatpush1.xpose.msra.mxu0 %v171
      %211 = vmatprep.subr.mxu0 0.0
      %212 = vmatpush1.xpose.msra.mxu0 0.0
      %213 = vmatprep.subr.mxu0 0.0
      %214 = vmatpush1.xpose.msra.mxu0 0.0
      %215 = vmatprep.subr.mxu0 0.0
      %216 = vmatpush1.xpose.msra.mxu0 0.0
      %217 = vmatprep.subr.mxu0 0.0
      %218 = vmatpush1.xpose.msra.mxu0 0.0
      %219 = vmatprep.subr.mxu0 0.0
      %220 = vmatpush1.xpose.msra.mxu0 0.0
      %221 = vmatprep.subr.mxu0 0.0
      %222 = vmatpush1.xpose.msra.mxu0 0.0
      %223 = vmatprep.subr.mxu0 0.0
      %224 = vmatpush1.xpose.msra.mxu0 0.0
      %225 = vmatprep.subr.mxu0 0.0
      %226 = vmatpush1.xpose.msra.mxu0 0.0
      %227 = vmatprep.subr.mxu0 0.0
      %228 = vmatpush1.xpose.msra.mxu0 0.0
      %229 = vmatprep.subr.mxu0 0.0
      %230 = vmatpush1.xpose.msra.mxu0 0.0
      %231 = vmatprep.subr.mxu0 0.0
      %232 = vmatpush1.xpose.msra.mxu0 0.0
      %233 = vmatprep.subr.mxu0 0.0
      %234 = vmatpush1.xpose.msra.mxu0 0.0
      %235 = vmatprep.subr.mxu0 0.0
      %236 = vmatpush1.xpose.msra.mxu0 0.0
      %237 = vmatprep.subr.mxu0 0.0
      %238 = vmatpush1.xpose.msra.mxu0 0.0
      %239 = vmatprep.subr.mxu0 0.0
      %240 = vmatpush1.xpose.msra.mxu0 0.0
      %241 = vmatprep.subr.mxu0 0.0
      %242 = vmatpush1.xpose.msra.mxu0 0.0
      %243 = vmatprep.mubr.f32.mxu0 0.0
      %244 = vmatmul.mubr.f32.gmra.mrb[0].mxu0 %v155
      %v245 = vpop.f32.mrb[0].mxu0
      %v246 = vadd.f32 %v177, %v245
      %v247 = vpop.f32.mrb[0].mxu0
      %248 = vdwg.mxu0
      %249 = vst [vmem:[#allocation9] sm:$0xff] %v246
    $region37: #{tpu_custom_call.1} parent=1 // pred_fallthru
      _
    // Predicated region
    $region38: #{tpu_custom_call.1} parent=1 // pred_check
      _
    $region39: #{tpu_custom_call.1} parent=1 // pred_check_branch
      %251 = sbr.rel (0) target = $region41
    $region40: #{tpu_custom_call.1} parent=1 // pred_region
      %s253 = ssub.s32 128, 128
      %254 = vsyncadd [#allocation5], %s253
      %s256 = sshll.u32 [#allocation9], 4
      %s257 = int_to_ptr.vmem [resolvable:$true] %s256
      %259 = dma.vmem_to_hbm [thread:$0]  %s257, 128, %s4, [#allocation5]
    $region41: #{tpu_custom_call.1} parent=1 // pred_fallthru
      _
    // Predicated region
    $region42: #{tpu_custom_call.1} parent=1 // pred_check
      _
    $region43: #{tpu_custom_call.1} parent=1 // pred_check_branch
      %261 = sbr.rel (0) target = $region45
    $region44: #{tpu_custom_call.1} parent=1 // pred_region
      %262 = dma.done [#allocation5], 128
    $region45: #{tpu_custom_call.1} parent=1 // pred_fallthru
      _
    %263 = vsyncpa [#allocation4], 1
    %264 = vsyncpa [#allocation7], 1
    %265 = vsyncpa [#allocation5], 1

</llo_original>
